<compile_context>
chip_gen: v7x
topology: tpu7x:2x2x1
jax: 0.10.0
libtpu: 0.0.40
codegen_flags: <defaults>
</compile_context>

<pallas_src>
import jax
import jax.numpy as jnp
from jax.experimental import pallas as pl
from jax.experimental.pallas import tpu as pltpu

LANES = 128
ACC_SUBLANES = 8                  # accumulator is one f32 vreg: (8, 128)
MAX_BLOCK_ROWS = 2048             # (2048, 128) f32 = 1 MiB per input per step
NUM_SHARDS = 2                    # leading "parallel" axis (2 TCs on v7x)


def _make_kernel(rows, block_rows, blocks_per_shard, needs_mask):
    """Kernel factory; rows / block sizes are baked in as static closure values."""

    def kernel(pred_ref, target_ref, cout_ref, out_ref):
        c = pl.program_id(0)          # shard (core) index
        i = pl.program_id(1)          # block index within shard

        @pl.when(i == 0)
        def _():
            out_ref[...] = jnp.zeros_like(out_ref)

        pred = pred_ref[...].astype(jnp.float32)
        target = target_ref[...].astype(jnp.float32)
        cout = cout_ref[...].astype(jnp.float32)

        val = (target != 0.0).astype(jnp.float32)
        diff = (pred - target) * val
        adiff = jnp.abs(diff)
        # smooth_l1 with beta = 1.0 (PyTorch default)
        err = jnp.where(adiff < 1.0, 0.5 * diff * diff, adiff - 0.5)
        # err - cout*val + err*cout*val  ==  err + cout*val*(err - 1)
        loss = err + cout * val * (err - 1.0)

        if needs_mask:
            # Zero rows past the true row count (partial last block or a shard
            # whose clamped block index re-reads an already-counted block).
            row_start = (c * blocks_per_shard + i) * block_rows
            row_ids = row_start + jax.lax.broadcasted_iota(
                jnp.int32, loss.shape, 0)
            loss = jnp.where(row_ids < rows, loss, 0.0)

        # Fold the (block_rows, 128) block into one (8, 128) vreg with pure
        # VPU adds; the output block is resident across the inner grid axis.
        partial = loss.reshape(-1, ACC_SUBLANES, LANES).sum(axis=0)
        out_ref[...] += partial.reshape(out_ref.shape)

    return kernel


def _loss_terms(pred, target, cout):
    val = (target != 0.0).astype(jnp.float32)
    diff = (pred - target) * val
    adiff = jnp.abs(diff)
    err = jnp.where(adiff < 1.0, 0.5 * diff * diff, adiff - 0.5)
    return err + cout * val * (err - 1.0)


def conf_loss(pred, target, cout):
    """Pallas implementation of ConfLoss.forward. Inputs share a shape (NCHW)."""
    assert pred.shape == target.shape == cout.shape
    n = pred.size
    flat = [x.reshape(-1) for x in (pred, target, cout)]   # free: contiguous reshape

    chunk = ACC_SUBLANES * LANES                           # 1024 elements
    bulk = (n // chunk) * chunk
    total = jnp.zeros((), jnp.float32)

    if bulk > 0:
        rows = bulk // LANES                               # multiple of 8
        block_rows = min(MAX_BLOCK_ROWS, rows)             # multiple of 8
        num_blocks = pl.cdiv(rows, block_rows)
        num_shards = NUM_SHARDS if num_blocks >= NUM_SHARDS else 1
        blocks_per_shard = pl.cdiv(num_blocks, num_shards)
        needs_mask = (rows % block_rows != 0) or (num_blocks % num_shards != 0)

        # No pad, no dtype copy: slice only if there is a tail, then reshape.
        slabs = [(x if bulk == n else x[:bulk]).reshape(rows, LANES) for x in flat]

        in_spec = pl.BlockSpec(
            (block_rows, LANES),
            # Clamp to a valid block; duplicated blocks are zeroed by the mask.
            lambda c, i: (jnp.minimum(c * blocks_per_shard + i, num_blocks - 1), 0),
        )
        out_spec = pl.BlockSpec((1, ACC_SUBLANES, LANES), lambda c, i: (c, 0, 0))

        partials = pl.pallas_call(
            _make_kernel(rows, block_rows, blocks_per_shard, needs_mask),
            out_shape=jax.ShapeDtypeStruct(
                (num_shards, ACC_SUBLANES, LANES), jnp.float32),
            grid_spec=pltpu.PrefetchScalarGridSpec(
                num_scalar_prefetch=0,
                grid=(num_shards, blocks_per_shard),
                in_specs=[in_spec, in_spec, in_spec],
                out_specs=out_spec,
            ),
            compiler_params=pltpu.CompilerParams(
                dimension_semantics=("parallel", "arbitrary"),
                vmem_limit_bytes=32 * 1024 * 1024,
            ),
        )(*slabs)
        total = total + jnp.sum(partials)

    if bulk != n:
        # Sub-1024-element tail: trivial plain-JAX path (avoids padded HBM copies).
        tail = [x[bulk:].astype(jnp.float32) for x in flat]
        total = total + jnp.sum(_loss_terms(*tail))

    return total / jnp.float32(n)


def _reference(pred, target, cout):
    val = (target != 0).astype(jnp.float32)
    diff = pred * val - target * val
    adiff = jnp.abs(diff)
    err = jnp.where(adiff < 1.0, 0.5 * diff * diff, adiff - 0.5)
    loss = err - cout * val + err * cout * val
    return jnp.mean(loss)


if __name__ == "__main__":
    key = jax.random.PRNGKey(0)
    k1, k2, k3, k4 = jax.random.split(key, 4)

    B, C, H, W = 2, 4, 16, 16  # NCHW
    pred = jax.random.normal(k1, (B, C, H, W), dtype=jnp.float32)
    target = jax.random.normal(k2, (B, C, H, W), dtype=jnp.float32)
    # Sparsify target so some pixels are exactly zero (invalid pixels).
    mask = jax.random.bernoulli(k3, 0.7, (B, C, H, W))
    target = target * mask.astype(jnp.float32)
    cout = jax.nn.sigmoid(jax.random.normal(k4, (B, C, H, W), dtype=jnp.float32))

    out = conf_loss(pred, target, cout)
    jax.block_until_ready(out)

    ref = _reference(pred, target, cout)
    assert jnp.allclose(out, ref, atol=1e-5, rtol=1e-5), (out, ref)

    print("KERNEL_OK")
</pallas_src>

<mosaic_0001>
module attributes {stable_mosaic.version = 11 : i64} {
  func.func @kernel(%arg0: i32, %arg1: i32, %arg2: memref<16x128xf32, #tpu.memory_space<vmem>>, %arg3: memref<16x128xf32, #tpu.memory_space<vmem>>, %arg4: memref<16x128xf32, #tpu.memory_space<vmem>>, %arg5: memref<1x8x128xf32, #tpu.memory_space<vmem>>) attributes {dimension_semantics = [#tpu.dimension_semantics<parallel>, #tpu.dimension_semantics<arbitrary>], iteration_bounds = array<i64: 1, 1>, scalar_prefetch = 0 : i64, scratch_operands = 0 : i64, tpu.core_type = #tpu.core_type<tc>, window_params = [{transform_indices = @transform_0, window_bounds = array<i64: 16, 128>}, {transform_indices = @transform_1, window_bounds = array<i64: 16, 128>}, {transform_indices = @transform_2, window_bounds = array<i64: 16, 128>}, {transform_indices = @transform_3, window_bounds = array<i64: 1, 8, 128>}]} {
    %c0_i32 = arith.constant 0 : i32
    %0 = arith.cmpi eq, %arg1, %c0_i32 : i32
    %1 = arith.extui %0 : i1 to i32
    %c0_i32_0 = arith.constant 0 : i32
    %2 = arith.cmpi ne, %1, %c0_i32_0 : i32
    scf.if %2 {
      %cst_17 = arith.constant 0.000000e+00 : f32
      %32 = vector.broadcast %cst_17 : f32 to vector<1x8x128xf32>
      %c0_18 = arith.constant 0 : index
      %c0_19 = arith.constant 0 : index
      %c0_20 = arith.constant 0 : index
      %33 = vector.load %arg5[%c0_18, %c0_19, %c0_20] : memref<1x8x128xf32, #tpu.memory_space<vmem>>, vector<1x8x128xf32>
      tpu.vector_store %arg5[%c0_18, %c0_19, %c0_20], %32 {strides = array<i32>} : memref<1x8x128xf32, #tpu.memory_space<vmem>>, vector<1x8x128xf32>,
    } else {
    }
    %c0 = arith.constant 0 : index
    %c0_1 = arith.constant 0 : index
    %3 = vector.load %arg2[%c0, %c0_1] : memref<16x128xf32, #tpu.memory_space<vmem>>, vector<16x128xf32>
    %c0_2 = arith.constant 0 : index
    %c0_3 = arith.constant 0 : index
    %4 = vector.load %arg3[%c0_2, %c0_3] : memref<16x128xf32, #tpu.memory_space<vmem>>, vector<16x128xf32>
    %c0_4 = arith.constant 0 : index
    %c0_5 = arith.constant 0 : index
    %5 = vector.load %arg4[%c0_4, %c0_5] : memref<16x128xf32, #tpu.memory_space<vmem>>, vector<16x128xf32>
    %cst = arith.constant 0.000000e+00 : f32
    %6 = vector.broadcast %cst : f32 to vector<16x128xf32>
    %7 = arith.cmpf one, %4, %6 : vector<16x128xf32>
    %8 = arith.extui %7 : vector<16x128xi1> to vector<16x128xi32>
    %9 = arith.sitofp %8 : vector<16x128xi32> to vector<16x128xf32>
    %10 = arith.subf %3, %4 : vector<16x128xf32>
    %11 = arith.mulf %10, %9 : vector<16x128xf32>
    %12 = math.absf %11 : vector<16x128xf32>
    %cst_6 = arith.constant 1.000000e+00 : f32
    %13 = vector.broadcast %cst_6 : f32 to vector<16x128xf32>
    %14 = arith.cmpf olt, %12, %13 : vector<16x128xf32>
    %cst_7 = arith.constant 5.000000e-01 : f32
    %15 = vector.broadcast %cst_7 : f32 to vector<16x128xf32>
    %16 = arith.mulf %15, %11 : vector<16x128xf32>
    %17 = arith.mulf %16, %11 : vector<16x128xf32>
    %cst_8 = arith.constant 5.000000e-01 : f32
    %18 = vector.broadcast %cst_8 : f32 to vector<16x128xf32>
    %19 = arith.subf %12, %18 : vector<16x128xf32>
    %20 = arith.select %14, %17, %19 : vector<16x128xi1>, vector<16x128xf32>
    %21 = arith.mulf %5, %9 : vector<16x128xf32>
    %cst_9 = arith.constant 1.000000e+00 : f32
    %22 = vector.broadcast %cst_9 : f32 to vector<16x128xf32>
    %23 = arith.subf %20, %22 : vector<16x128xf32>
    %24 = arith.mulf %21, %23 : vector<16x128xf32>
    %25 = arith.addf %20, %24 : vector<16x128xf32>
    %26 = vector.shape_cast %25 : vector<16x128xf32> to vector<2x8x128xf32>
    %cst_10 = arith.constant dense<0.000000e+00> : vector<8x128xf32>
    %27 = vector.multi_reduction <add>, %26, %cst_10 [0] : vector<2x8x128xf32> to vector<8x128xf32>
    %c0_11 = arith.constant 0 : index
    %c0_12 = arith.constant 0 : index
    %c0_13 = arith.constant 0 : index
    %28 = vector.load %arg5[%c0_11, %c0_12, %c0_13] : memref<1x8x128xf32, #tpu.memory_space<vmem>>, vector<1x8x128xf32>
    %29 = vector.shape_cast %27 : vector<8x128xf32> to vector<1x8x128xf32>
    %30 = arith.addf %28, %29 : vector<1x8x128xf32>
    %c0_14 = arith.constant 0 : index
    %c0_15 = arith.constant 0 : index
    %c0_16 = arith.constant 0 : index
    %31 = vector.load %arg5[%c0_14, %c0_15, %c0_16] : memref<1x8x128xf32, #tpu.memory_space<vmem>>, vector<1x8x128xf32>
    tpu.vector_store %arg5[%c0_14, %c0_15, %c0_16], %30 {strides = array<i32>} : memref<1x8x128xf32, #tpu.memory_space<vmem>>, vector<1x8x128xf32>,
    return
  }
  func.func @transform_0(%arg0: i32, %arg1: i32) -> (i32, i32) {
    %c1_i32 = arith.constant 1 : i32
    %0 = arith.muli %arg0, %c1_i32 : i32
    %1 = arith.addi %0, %arg1 : i32
    %c0_i32 = arith.constant 0 : i32
    %2 = arith.minsi %1, %c0_i32 : i32
    %c0_i32_0 = arith.constant 0 : i32
    %c0_i32_1 = arith.constant 0 : i32
    return %2, %c0_i32_0 : i32, i32
  }
  func.func @transform_1(%arg0: i32, %arg1: i32) -> (i32, i32) {
    %c1_i32 = arith.constant 1 : i32
    %0 = arith.muli %arg0, %c1_i32 : i32
    %1 = arith.addi %0, %arg1 : i32
    %c0_i32 = arith.constant 0 : i32
    %2 = arith.minsi %1, %c0_i32 : i32
    %c0_i32_0 = arith.constant 0 : i32
    %c0_i32_1 = arith.constant 0 : i32
    return %2, %c0_i32_0 : i32, i32
  }
  func.func @transform_2(%arg0: i32, %arg1: i32) -> (i32, i32) {
    %c1_i32 = arith.constant 1 : i32
    %0 = arith.muli %arg0, %c1_i32 : i32
    %1 = arith.addi %0, %arg1 : i32
    %c0_i32 = arith.constant 0 : i32
    %2 = arith.minsi %1, %c0_i32 : i32
    %c0_i32_0 = arith.constant 0 : i32
    %c0_i32_1 = arith.constant 0 : i32
    return %2, %c0_i32_0 : i32, i32
  }
  func.func @transform_3(%arg0: i32, %arg1: i32) -> (i32, i32, i32) {
    %c0_i32 = arith.constant 0 : i32
    %c0_i32_0 = arith.constant 0 : i32
    %c0_i32_1 = arith.constant 0 : i32
    return %arg0, %c0_i32, %c0_i32_0 : i32, i32, i32
  }
}

</mosaic_0001>

<llo_original>
// kernel: tpu_custom_call.1
$region0: #{tpu_custom_call.1}
  #allocation0 [shape = 'u32[]', space=smem, size = 0x4, offset = 0x4, fixed_abs, tag = 'smem constant byte address 0x4 - core index']
  #allocation1 [shape = 'u32[144,128]{1,0:T(1,128)}', space=vmem, size = 0x12000, scoped, tag = 'internal scratch']
  %s0 = inlined_call_operand.hbm [shape: f32[16,128], index: 0, kind: input, shape index: {}]
  %s1 = inlined_call_operand.hbm [shape: f32[16,128], index: 1, kind: input, shape index: {}]
  %s2 = inlined_call_operand.hbm [shape: f32[16,128], index: 2, kind: input, shape index: {}]
  %s3 = inlined_call_operand.hbm [shape: f32[1,8,128], index: 3, kind: output, shape index: {}]
  %s4 = sld [smem:[#allocation0]]
  $region38: #{tpu_custom_call.1} parent=0
    _
  %s6 = ssub.s32 1, %s4
  %s7 = scalar_select 0, %s6, %s4
  $region1: #{tpu_custom_call.1} parent=0
    #allocation2 [shape = 'u8[8192]{0}', space=vmem, size = 0x2000, scoped, tag = 'input window, operand 0, single buffered']
    #allocation3 [shape = 's32[1]{0}', space=sflag, size = 0x4, scoped, tag = 'scoped memory for tpu_custom_call.1']
    #allocation4 [shape = 's32[1]{0}', space=sflag, size = 0x4, scoped, tag = 'scoped memory for tpu_custom_call.1']
    #allocation5 [shape = 'u8[8192]{0}', space=vmem, size = 0x2000, scoped, tag = 'input window, operand 1, single buffered']
    #allocation6 [shape = 's32[1]{0}', space=sflag, size = 0x4, scoped, tag = 'scoped memory for tpu_custom_call.1']
    #allocation7 [shape = 'u8[8192]{0}', space=vmem, size = 0x2000, scoped, tag = 'input window, operand 2, single buffered']
    #allocation8 [shape = 'u8[4096]{0}', space=vmem, size = 0x1000, scoped, tag = 'output window, operand 0, single buffered']
    %8 = vsyncpa [#allocation3], 0
    %9 = vsyncpa [#allocation6], 0
    %10 = vsyncpa [#allocation4], 0
    // Predicated region
    $region2: #{tpu_custom_call.1} parent=1 // pred_check
      _
    $region3: #{tpu_custom_call.1} parent=1 // pred_check_branch
      %12 = sbr.rel (0) target = $region5
    $region4: #{tpu_custom_call.1} parent=1 // pred_region
      %s13 = sadd.s32 0, 0
      %p14 = scmp.lt.s32.totalorder %s13, 0
      %s15 = scalar_select %p14, %s13, 0
      %s16 = smul.u32 2, %s15
      %s18 = ssub.s32 256, 256
      %19 = vsyncadd [#allocation3], %s18
      %s20 = smul.addr %s16, 128
      %s21 = scalar_lea.hbm %s0, %s20
      %s22 = sshll.u32 [#allocation2], 4
      %s23 = int_to_ptr.vmem [resolvable:$true] %s22
      %28 = dma.hbm_to_vmem [thread:$0]  %s21, 256, %s23, [#allocation3], 128, 128, 8
    $region5: #{tpu_custom_call.1} parent=1 // pred_fallthru
      _
    // Predicated region
    $region6: #{tpu_custom_call.1} parent=1 // pred_check
      _
    $region7: #{tpu_custom_call.1} parent=1 // pred_check_branch
      %30 = sbr.rel (0) target = $region9
    $region8: #{tpu_custom_call.1} parent=1 // pred_region
      %s31 = sadd.s32 0, 0
      %p32 = scmp.lt.s32.totalorder %s31, 0
      %s33 = scalar_select %p32, %s31, 0
      %s34 = smul.u32 2, %s33
      %s36 = ssub.s32 256, 256
      %37 = vsyncadd [#allocation6], %s36
      %s38 = smul.addr %s34, 128
      %s39 = scalar_lea.hbm %s1, %s38
      %s40 = sshll.u32 [#allocation5], 4
      %s41 = int_to_ptr.vmem [resolvable:$true] %s40
      %46 = dma.hbm_to_vmem [thread:$0]  %s39, 256, %s41, [#allocation6], 128, 128, 8
    $region9: #{tpu_custom_call.1} parent=1 // pred_fallthru
      _
    // Predicated region
    $region10: #{tpu_custom_call.1} parent=1 // pred_check
      _
    $region11: #{tpu_custom_call.1} parent=1 // pred_check_branch
      %48 = sbr.rel (0) target = $region13
    $region12: #{tpu_custom_call.1} parent=1 // pred_region
      %s49 = sadd.s32 0, 0
      %p50 = scmp.lt.s32.totalorder %s49, 0
      %s51 = scalar_select %p50, %s49, 0
      %s52 = smul.u32 2, %s51
      %s54 = ssub.s32 256, 256
      %55 = vsyncadd [#allocation6], %s54
      %s56 = smul.addr %s52, 128
      %s57 = scalar_lea.hbm %s2, %s56
      %s58 = sshll.u32 [#allocation7], 4
      %s59 = int_to_ptr.vmem [resolvable:$true] %s58
      %64 = dma.hbm_to_vmem [thread:$0]  %s57, 256, %s59, [#allocation6], 128, 128, 8
    $region13: #{tpu_custom_call.1} parent=1 // pred_fallthru
      _
    // Predicated region
    $region14: #{tpu_custom_call.1} parent=1 // pred_check
      _
    $region15: #{tpu_custom_call.1} parent=1 // pred_check_branch
      %66 = sbr.rel (0) target = $region17
    $region16: #{tpu_custom_call.1} parent=1 // pred_region
      %67 = dma.done [#allocation3], 256
    $region17: #{tpu_custom_call.1} parent=1 // pred_fallthru
      _
    // Predicated region
    $region18: #{tpu_custom_call.1} parent=1 // pred_check
      _
    $region19: #{tpu_custom_call.1} parent=1 // pred_check_branch
      %69 = sbr.rel (0) target = $region21
    $region20: #{tpu_custom_call.1} parent=1 // pred_region
      %70 = dma.done [#allocation6], 256
    $region21: #{tpu_custom_call.1} parent=1 // pred_fallthru
      _
    // Predicated region
    $region22: #{tpu_custom_call.1} parent=1 // pred_check
      _
    $region23: #{tpu_custom_call.1} parent=1 // pred_check_branch
      %72 = sbr.rel (0) target = $region25
    $region24: #{tpu_custom_call.1} parent=1 // pred_region
      %73 = dma.done [#allocation6], 256
    $region25: #{tpu_custom_call.1} parent=1 // pred_fallthru
      _
    %s74 = sadd.s32 0, 0
    %p75 = scmp.lt.s32.totalorder %s74, 0
    %s76 = scalar_select %p75, %s74, 0
    %s77 = smul.u32 2, %s76
    %s78 = sadd.s32 0, 0
    %p79 = scmp.lt.s32.totalorder %s78, 0
    %s80 = scalar_select %p79, %s78, 0
    %s81 = smul.u32 2, %s80
    %s82 = sadd.s32 0, 0
    %p83 = scmp.lt.s32.totalorder %s82, 0
    %s84 = scalar_select %p83, %s82, 0
    %s85 = smul.u32 2, %s84
    %p86 = scmp.eq.s32.totalorder 0, 0
    // Predicated region
    $region26: #{tpu_custom_call.1} parent=1 // pred_check
      %p87 = pneg %p86
    $region27: #{tpu_custom_call.1} parent=1 // pred_check_branch
      %89 = sbr.rel (%p87) target = $region29
    $region28: #{tpu_custom_call.1} parent=1 // pred_region
      %90 = vst [vmem:[#allocation8] sm:$0xff] 0.0
    $region29: #{tpu_custom_call.1} parent=1 // pred_fallthru
      _
    %v91 = vld [vmem:[#allocation2] sm:$0xff]
    %v92 = vld [vmem:[#allocation2 + $0x8] sm:$0xff]
    %v93 = vld [vmem:[#allocation5] sm:$0xff]
    %v94 = vld [vmem:[#allocation5 + $0x8] sm:$0xff]
    %v95 = vld [vmem:[#allocation7] sm:$0xff]
    %v96 = vld [vmem:[#allocation7 + $0x8] sm:$0xff]
    %vm97 = vcmp.ne.f32.partialorder %v93, 0.0
    %vm98 = vcmp.ne.f32.partialorder %v94, 0.0
    %v99 = vsel %vm97, 1, 0
    %v100 = vsel %vm98, 1, 0
    %v101 = vcvt.s32.f32 %v99
    %v102 = vcvt.s32.f32 %v100
    %v103 = vsub.f32 %v91, %v93
    %v104 = vsub.f32 %v92, %v94
    %v105 = vmul.f32 %v103, %v101
    %v106 = vmul.f32 %v104, %v102
    %v107 = vand.u32 2147483647, %v105
    %v108 = vand.u32 2147483647, %v106
    %vm109 = vcmp.lt.f32.partialorder %v107, 1.0
    %vm110 = vcmp.lt.f32.partialorder %v108, 1.0
    %v111 = vmul.f32 %v105, 0.5
    %v112 = vmul.f32 %v106, 0.5
    %v113 = vmul.f32 %v111, %v105
    %v114 = vmul.f32 %v112, %v106
    %v115 = vsub.f32 %v107, 0.5
    %v116 = vsub.f32 %v108, 0.5
    %v117 = vsel %vm109, %v113, %v115
    %v118 = vsel %vm110, %v114, %v116
    %v119 = vmul.f32 %v95, %v101
    %v120 = vmul.f32 %v96, %v102
    %v121 = vsub.f32 %v117, 1.0
    %v122 = vsub.f32 %v118, 1.0
    %v123 = vmul.f32 %v119, %v121
    %v124 = vmul.f32 %v120, %v122
    %v125 = vadd.f32 %v117, %v123
    %v126 = vadd.f32 %v118, %v124
    %v127 = vadd.f32 %v125, %v126
    %v128 = vld [vmem:[#allocation8] sm:$0xff]
    %v129 = vadd.f32 %v128, %v127
    %130 = vst [vmem:[#allocation8] sm:$0xff] %v129
    // Predicated region
    $region30: #{tpu_custom_call.1} parent=1 // pred_check
      _
    $region31: #{tpu_custom_call.1} parent=1 // pred_check_branch
      %132 = sbr.rel (0) target = $region33
    $region32: #{tpu_custom_call.1} parent=1 // pred_region
      %s134 = ssub.s32 128, 128
      %135 = vsyncadd [#allocation4], %s134
      %s137 = sshll.u32 [#allocation8], 4
      %s138 = int_to_ptr.vmem [resolvable:$true] %s137
      %140 = dma.vmem_to_hbm [thread:$0]  %s138, 128, %s3, [#allocation4]
    $region33: #{tpu_custom_call.1} parent=1 // pred_fallthru
      _
    // Predicated region
    $region34: #{tpu_custom_call.1} parent=1 // pred_check
      _
    $region35: #{tpu_custom_call.1} parent=1 // pred_check_branch
      %142 = sbr.rel (0) target = $region37
    $region36: #{tpu_custom_call.1} parent=1 // pred_region
      %143 = dma.done [#allocation4], 128
    $region37: #{tpu_custom_call.1} parent=1 // pred_fallthru
      _
    %144 = vsyncpa [#allocation3], 1
    %145 = vsyncpa [#allocation6], 1
    %146 = vsyncpa [#allocation4], 1

</llo_original>
